<compile_context>
chip_gen: v5e
topology: v5e:2x2
jax: 0.10.0
libtpu: 0.0.40
codegen_flags: <defaults>
</compile_context>

<pallas_src>
import functools

import jax
import jax.numpy as jnp
from jax.experimental import pallas as pl
from jax.experimental.pallas import tpu as pltpu

IN_FEATURES = 512
HIDDEN = 128


def mlp_kernel(x_ref, w1_ref, b1_ref, w2_ref, b2_ref, o_ref, *, precision):
    # x_ref : (TB, 512)   VMEM, double-buffered along the batch grid axis
    # w1_ref: (512, 128)  VMEM, resident across grid steps (constant index_map)
    # b1_ref: (1, 128)    VMEM, resident
    # w2_ref: (1, 128)    VMEM, resident (fc2 weight as a row)
    # b2_ref: (1, 1)      SMEM scalar
    # o_ref : (TB, 1)
    # fc1 on the MXU with f32 accumulation (inputs may be f32 or bf16).
    h = jnp.dot(x_ref[...], w1_ref[...],
                preferred_element_type=jnp.float32, precision=precision)
    h = jnp.maximum(h + b1_ref[...].astype(jnp.float32), 0.0)  # bias + ReLU on the VPU
    # fc2: (TB,128) @ (128,1) would waste an MXU push on a single output column;
    # do it as a VPU multiply + lane (XLU) reduction against the w2 row instead.
    y = (jnp.sum(h * w2_ref[...].astype(jnp.float32), axis=-1, keepdims=True)
         + b2_ref[0, 0])
    o_ref[...] = y.astype(o_ref.dtype)


def _cdiv(a, b):
    return (a + b - 1) // b


def _round_up(x, m):
    return ((x + m - 1) // m) * m


@functools.partial(jax.jit, static_argnames=("block_b", "precision"))
def simple_model(x, w1, b1, w2, b2, *, block_b=4096, precision=None):
    """relu(x @ w1 + b1) @ w2 + b2, x: (B, 512) -> (B, 1)."""
    B = x.shape[0]
    # Balanced batch tiles: cap at block_b, keep all tiles similar size so the
    # ragged last block is never pathologically small; no jnp.pad of x.
    num_tiles = max(1, _cdiv(B, block_b))
    tb = _round_up(_cdiv(B, num_tiles), 8)   # sublane-aligned block
    grid = (_cdiv(B, tb),)

    w2_row = w2.reshape(1, HIDDEN)  # (128, 1) -> (1, 128) row for the VPU reduction
    b2_sc = b2.reshape(1, 1)

    out = pl.pallas_call(
        functools.partial(mlp_kernel, precision=precision),
        out_shape=jax.ShapeDtypeStruct((B, 1), jnp.float32),
        grid_spec=pltpu.PrefetchScalarGridSpec(
            num_scalar_prefetch=0,
            grid=grid,
            in_specs=[
                pl.BlockSpec((tb, IN_FEATURES), lambda i: (i, 0)),
                pl.BlockSpec((IN_FEATURES, HIDDEN), lambda i: (0, 0)),
                pl.BlockSpec((1, HIDDEN), lambda i: (0, 0)),
                pl.BlockSpec((1, HIDDEN), lambda i: (0, 0)),
                pl.BlockSpec((1, 1), lambda i: (0, 0),
                             memory_space=pltpu.MemorySpace.SMEM),
            ],
            out_specs=pl.BlockSpec((tb, 1), lambda i: (i, 0)),
        ),
        compiler_params=pltpu.CompilerParams(
            # Batch tiles are fully independent -> shard across TCs on v7x.
            dimension_semantics=("parallel",),
            # ~20 MiB actually used at TB=4096 (f32); 48 MiB unblocks v5e's 16 MiB
            # default scoped VMEM, allows TB~8192 on v6e, fits v7x's 64 MiB/TC.
            vmem_limit_bytes=48 << 20,
        ),
    )(x, w1, b1, w2_row, b2_sc)
    return out


def init_params(key):
    # PyTorch-style init: U(-1/sqrt(fan_in), +1/sqrt(fan_in)); weights stored [in, out].
    k1, k2, k3, k4 = jax.random.split(key, 4)
    bound1 = 1.0 / jnp.sqrt(512.0)
    bound2 = 1.0 / jnp.sqrt(128.0)
    w1 = jax.random.uniform(k1, (IN_FEATURES, HIDDEN), jnp.float32, -bound1, bound1)
    b1 = jax.random.uniform(k2, (1, HIDDEN), jnp.float32, -bound1, bound1)
    w2 = jax.random.uniform(k3, (HIDDEN, 1), jnp.float32, -bound2, bound2)
    b2 = jax.random.uniform(k4, (1, 1), jnp.float32, -bound2, bound2)
    return w1, b1, w2, b2


def _reference(x, w1, b1, w2, b2):
    return jnp.maximum(x @ w1 + b1, 0.0) @ w2 + b2


if __name__ == "__main__":
    key = jax.random.PRNGKey(0)
    kx, kx2, kp = jax.random.split(key, 3)
    w1, b1, w2, b2 = init_params(kp)

    # Small demo batch: single-block path (no tiling overhead at tiny B).
    B = 8
    x = jax.random.normal(kx, (B, IN_FEATURES), jnp.float32)
    out = jax.block_until_ready(simple_model(x, w1, b1, w2, b2))
    ref = _reference(x, w1, b1, w2, b2)
    assert out.shape == (B, 1)
    assert jnp.allclose(out, ref, atol=1e-4, rtol=1e-4)

    # Exercise the multi-tile + ragged-last-block path (B not a multiple of the tile).
    B2 = 300
    x2 = jax.random.normal(kx2, (B2, IN_FEATURES), jnp.float32)
    out2 = jax.block_until_ready(simple_model(x2, w1, b1, w2, b2, block_b=128))
    ref2 = _reference(x2, w1, b1, w2, b2)
    assert out2.shape == (B2, 1)
    assert jnp.allclose(out2, ref2, atol=1e-4, rtol=1e-4)

    print("KERNEL_OK")
</pallas_src>

<mosaic_0001>
module attributes {stable_mosaic.version = 11 : i64} {
  func.func @mlp_kernel(%arg0: i32, %arg1: memref<8x512xf32, #tpu.memory_space<vmem>>, %arg2: memref<512x128xf32, #tpu.memory_space<vmem>>, %arg3: memref<1x128xf32, #tpu.memory_space<vmem>>, %arg4: memref<1x128xf32, #tpu.memory_space<vmem>>, %arg5: memref<1x1xf32, #tpu.memory_space<smem>>, %arg6: memref<8x1xf32, #tpu.memory_space<vmem>>) attributes {dimension_semantics = [#tpu.dimension_semantics<parallel>], iteration_bounds = array<i64: 1>, scalar_prefetch = 0 : i64, scratch_operands = 0 : i64, tpu.core_type = #tpu.core_type<tc>, window_params = [{transform_indices = @transform_0, window_bounds = array<i64: 8, 512>}, {pipeline_mode = #tpu.pipeline_mode<synchronous>, transform_indices = @transform_1, window_bounds = array<i64: 512, 128>}, {pipeline_mode = #tpu.pipeline_mode<synchronous>, transform_indices = @transform_2, window_bounds = array<i64: 1, 128>}, {pipeline_mode = #tpu.pipeline_mode<synchronous>, transform_indices = @transform_3, window_bounds = array<i64: 1, 128>}, {transform_indices = @transform_4, window_bounds = array<i64: 1, 1>}, {transform_indices = @transform_5, window_bounds = array<i64: 8, 1>}]} {
    %c0 = arith.constant 0 : index
    %c0_0 = arith.constant 0 : index
    %0 = vector.load %arg1[%c0, %c0_0] : memref<8x512xf32, #tpu.memory_space<vmem>>, vector<8x512xf32>
    %c0_1 = arith.constant 0 : index
    %c0_2 = arith.constant 0 : index
    %1 = vector.load %arg2[%c0_1, %c0_2] : memref<512x128xf32, #tpu.memory_space<vmem>>, vector<512x128xf32>
    %cst = arith.constant dense<0.000000e+00> : vector<8x128xf32>
    %2 = tpu.matmul %0, %1, %cst {dimension_numbers = #tpu.dot_dimension_numbers<[1], [0], [0], [1], [0, 0, 1, 1], [], []>} : vector<8x512xf32>, vector<512x128xf32>, vector<8x128xf32> -> vector<8x128xf32>
    %c0_3 = arith.constant 0 : index
    %c0_4 = arith.constant 0 : index
    %3 = vector.load %arg3[%c0_3, %c0_4] : memref<1x128xf32, #tpu.memory_space<vmem>>, vector<1x128xf32>
    %4 = vector.broadcast %3 : vector<1x128xf32> to vector<8x128xf32>
    %5 = arith.addf %2, %4 : vector<8x128xf32>
    %cst_5 = arith.constant 0.000000e+00 : f32
    %6 = vector.broadcast %cst_5 : f32 to vector<8x128xf32>
    %7 = arith.maximumf %5, %6 : vector<8x128xf32>
    %c0_6 = arith.constant 0 : index
    %c0_7 = arith.constant 0 : index
    %8 = vector.load %arg4[%c0_6, %c0_7] : memref<1x128xf32, #tpu.memory_space<vmem>>, vector<1x128xf32>
    %9 = vector.broadcast %8 : vector<1x128xf32> to vector<8x128xf32>
    %10 = arith.mulf %7, %9 : vector<8x128xf32>
    %cst_8 = arith.constant dense<0.000000e+00> : vector<8xf32>
    %11 = vector.multi_reduction <add>, %10, %cst_8 [1] : vector<8x128xf32> to vector<8xf32>
    %12 = vector.shape_cast %11 : vector<8xf32> to vector<8x1xf32>
    %c0_9 = arith.constant 0 : index
    %c0_10 = arith.constant 0 : index
    %13 = memref.load %arg5[%c0_9, %c0_10] : memref<1x1xf32, #tpu.memory_space<smem>>
    %14 = vector.broadcast %13 : f32 to vector<8x1xf32>
    %15 = arith.addf %12, %14 : vector<8x1xf32>
    %c0_11 = arith.constant 0 : index
    %c0_12 = arith.constant 0 : index
    %16 = vector.load %arg6[%c0_11, %c0_12] : memref<8x1xf32, #tpu.memory_space<vmem>>, vector<8x1xf32>
    tpu.vector_store %arg6[%c0_11, %c0_12], %15 {strides = array<i32>} : memref<8x1xf32, #tpu.memory_space<vmem>>, vector<8x1xf32>,
    return
  }
  func.func @transform_0(%arg0: i32) -> (i32, i32) {
    %c0_i32 = arith.constant 0 : i32
    %c0_i32_0 = arith.constant 0 : i32
    return %arg0, %c0_i32 : i32, i32
  }
  func.func @transform_1(%arg0: i32) -> (i32, i32) {
    %c0_i32 = arith.constant 0 : i32
    %c0_i32_0 = arith.constant 0 : i32
    %c0_i32_1 = arith.constant 0 : i32
    return %c0_i32, %c0_i32_0 : i32, i32
  }
  func.func @transform_2(%arg0: i32) -> (i32, i32) {
    %c0_i32 = arith.constant 0 : i32
    %c0_i32_0 = arith.constant 0 : i32
    %c0_i32_1 = arith.constant 0 : i32
    return %c0_i32, %c0_i32_0 : i32, i32
  }
  func.func @transform_3(%arg0: i32) -> (i32, i32) {
    %c0_i32 = arith.constant 0 : i32
    %c0_i32_0 = arith.constant 0 : i32
    %c0_i32_1 = arith.constant 0 : i32
    return %c0_i32, %c0_i32_0 : i32, i32
  }
  func.func @transform_4(%arg0: i32) -> (i32, i32) {
    %c0_i32 = arith.constant 0 : i32
    %c0_i32_0 = arith.constant 0 : i32
    %c0_i32_1 = arith.constant 0 : i32
    return %c0_i32, %c0_i32_0 : i32, i32
  }
  func.func @transform_5(%arg0: i32) -> (i32, i32) {
    %c0_i32 = arith.constant 0 : i32
    %c0_i32_0 = arith.constant 0 : i32
    return %arg0, %c0_i32 : i32, i32
  }
}

</mosaic_0001>

<llo_original>
// kernel: simple_model.1
$region0: #{simple_model.1}
  #allocation0 [shape = 'u32[]', space=smem, size = 0x4, offset = 0x4, fixed_abs, tag = 'smem constant byte address 0x4 - core index']
  #allocation1 [shape = 'u32[72,128]{1,0:T(1,128)}', space=vmem, size = 0x9000, scoped, tag = 'internal scratch']
  #allocation2 [shape = 'f32[1,1]{1,0:T(1,128)S(6)}', space=smem, size = 0x200, scoped, tag = 'scoped memory for simple_model.1']
  %s0 = inlined_call_operand.hbm [shape: f32[8,512], index: 0, kind: input, shape index: {}]
  %s1 = inlined_call_operand.hbm [shape: f32[512,128], index: 1, kind: input, shape index: {}]
  %s2 = inlined_call_operand.vmem [shape: f32[1,128], index: 2, kind: input, shape index: {}]
  %s3 = inlined_call_operand.vmem [shape: f32[1,128], index: 3, kind: input, shape index: {}]
  %s4 = inlined_call_operand.<no memory space> [shape: f32[1,1], index: 4, kind: input, shape index: {}]
  %s5 = inlined_call_operand.vmem [shape: f32[8,1], index: 5, kind: output, shape index: {}]
  %s6 = sld [smem:[#allocation0]]
  $region38: #{simple_model.1} parent=0
    _
  %s8 = ssub.s32 1, %s6
  %s9 = scalar_select 0, %s8, %s6
  %10 = sst [smem:[#allocation2]] %s4
  $region1: #{simple_model.1} parent=0
    #allocation3 [shape = 'u8[16384]{0}', space=vmem, size = 0x4000, scoped, tag = 'input window, operand 0, single buffered']
    #allocation4 [shape = 's32[1]{0}', space=sflag, size = 0x4, scoped, tag = 'scoped memory for simple_model.1']
    #allocation5 [shape = 'u8[262144]{0}', space=vmem, size = 0x40000, scoped, tag = 'input window, operand 1, single buffered']
    #allocation6 [shape = 's32[1]{0}', space=sflag, size = 0x4, scoped, tag = 'scoped memory for simple_model.1']
    %11 = vsyncpa [#allocation4], 0
    %12 = vsyncpa [#allocation6], 0
    // Predicated region
    $region2: #{simple_model.1} parent=1 // pred_check
      _
    $region3: #{simple_model.1} parent=1 // pred_check_branch
      %14 = sbr.rel (0) target = $region5
    $region4: #{simple_model.1} parent=1 // pred_region
      %16 = vsyncadd [#allocation4], 0
      %s18 = sshll.u32 %s0, 4
      %s19 = int_to_ptr.hbm [resolvable:$true] %s18
      %s20 = sshll.u32 [#allocation3], 4
      %s21 = int_to_ptr.vmem [resolvable:$true] %s20
      %23 = dma.hbm_to_vmem [thread:$0]  %s19, 512, %s21, [#allocation4]
    $region5: #{simple_model.1} parent=1 // pred_fallthru
      _
    // Predicated region
    $region6: #{simple_model.1} parent=1 // pred_check
      _
    $region7: #{simple_model.1} parent=1 // pred_check_branch
      %25 = sbr.rel (0) target = $region9
    $region8: #{simple_model.1} parent=1 // pred_region
      %27 = vsyncadd [#allocation6], 0
      %s28 = sshll.u32 %s1, 4
      %s29 = int_to_ptr.hbm [resolvable:$true] %s28
      %s30 = sshll.u32 [#allocation5], 4
      %s31 = int_to_ptr.vmem [resolvable:$true] %s30
      %36 = dma.hbm_to_vmem [thread:$0]  %s29, 8192, %s31, [#allocation6], 128, 128, 8
    $region9: #{simple_model.1} parent=1 // pred_fallthru
      _
    // Predicated region
    $region10: #{simple_model.1} parent=1 // pred_check
      _
    $region11: #{simple_model.1} parent=1 // pred_check_branch
      %38 = sbr.rel (0) target = $region13
    $region12: #{simple_model.1} parent=1 // pred_region
      _
    $region13: #{simple_model.1} parent=1 // pred_fallthru
      _
    // Predicated region
    $region14: #{simple_model.1} parent=1 // pred_check
      _
    $region15: #{simple_model.1} parent=1 // pred_check_branch
      %40 = sbr.rel (0) target = $region17
    $region16: #{simple_model.1} parent=1 // pred_region
      _
    $region17: #{simple_model.1} parent=1 // pred_fallthru
      _
    // Predicated region
    $region18: #{simple_model.1} parent=1 // pred_check
      _
    $region19: #{simple_model.1} parent=1 // pred_check_branch
      %42 = sbr.rel (0) target = $region21
    $region20: #{simple_model.1} parent=1 // pred_region
      _
    $region21: #{simple_model.1} parent=1 // pred_fallthru
      _
    // Predicated region
    $region22: #{simple_model.1} parent=1 // pred_check
      _
    $region23: #{simple_model.1} parent=1 // pred_check_branch
      %44 = sbr.rel (0) target = $region25
    $region24: #{simple_model.1} parent=1 // pred_region
      %46 = dma.done [#allocation4], 512
    $region25: #{simple_model.1} parent=1 // pred_fallthru
      _
    // Predicated region
    $region26: #{simple_model.1} parent=1 // pred_check
      _
    $region27: #{simple_model.1} parent=1 // pred_check_branch
      %48 = sbr.rel (0) target = $region29
    $region28: #{simple_model.1} parent=1 // pred_region
      %50 = dma.done [#allocation6], 8192
    $region29: #{simple_model.1} parent=1 // pred_fallthru
      _
    %v51 = vld [vmem:[#allocation3] sm:$0xff]
    %v52 = vld [vmem:[#allocation3 + $0x8] sm:$0xff]
    %v53 = vld [vmem:[#allocation3 + $0x10] sm:$0xff]
    %v54 = vld [vmem:[#allocation3 + $0x18] sm:$0xff]
    %v55 = vld [vmem:[#allocation5] sm:$0xff]
    %v56 = vld [vmem:[#allocation5 + $0x8] sm:$0xff]
    %v57 = vld [vmem:[#allocation5 + $0x10] sm:$0xff]
    %v58 = vld [vmem:[#allocation5 + $0x18] sm:$0xff]
    %v59 = vld [vmem:[#allocation5 + $0x20] sm:$0xff]
    %v60 = vld [vmem:[#allocation5 + $0x28] sm:$0xff]
    %v61 = vld [vmem:[#allocation5 + $0x30] sm:$0xff]
    %v62 = vld [vmem:[#allocation5 + $0x38] sm:$0xff]
    %v63 = vld [vmem:[#allocation5 + $0x40] sm:$0xff]
    %v64 = vld [vmem:[#allocation5 + $0x48] sm:$0xff]
    %v65 = vld [vmem:[#allocation5 + $0x50] sm:$0xff]
    %v66 = vld [vmem:[#allocation5 + $0x58] sm:$0xff]
    %v67 = vld [vmem:[#allocation5 + $0x60] sm:$0xff]
    %v68 = vld [vmem:[#allocation5 + $0x68] sm:$0xff]
    %v69 = vld [vmem:[#allocation5 + $0x70] sm:$0xff]
    %v70 = vld [vmem:[#allocation5 + $0x78] sm:$0xff]
    %v71 = vld [vmem:[#allocation5 + $0x80] sm:$0xff]
    %v72 = vld [vmem:[#allocation5 + $0x88] sm:$0xff]
    %v73 = vld [vmem:[#allocation5 + $0x90] sm:$0xff]
    %v74 = vld [vmem:[#allocation5 + $0x98] sm:$0xff]
    %v75 = vld [vmem:[#allocation5 + $0xa0] sm:$0xff]
    %v76 = vld [vmem:[#allocation5 + $0xa8] sm:$0xff]
    %v77 = vld [vmem:[#allocation5 + $0xb0] sm:$0xff]
    %v78 = vld [vmem:[#allocation5 + $0xb8] sm:$0xff]
    %v79 = vld [vmem:[#allocation5 + $0xc0] sm:$0xff]
    %v80 = vld [vmem:[#allocation5 + $0xc8] sm:$0xff]
    %v81 = vld [vmem:[#allocation5 + $0xd0] sm:$0xff]
    %v82 = vld [vmem:[#allocation5 + $0xd8] sm:$0xff]
    %v83 = vld [vmem:[#allocation5 + $0xe0] sm:$0xff]
    %v84 = vld [vmem:[#allocation5 + $0xe8] sm:$0xff]
    %v85 = vld [vmem:[#allocation5 + $0xf0] sm:$0xff]
    %v86 = vld [vmem:[#allocation5 + $0xf8] sm:$0xff]
    %v87 = vld [vmem:[#allocation5 + $0x100] sm:$0xff]
    %v88 = vld [vmem:[#allocation5 + $0x108] sm:$0xff]
    %v89 = vld [vmem:[#allocation5 + $0x110] sm:$0xff]
    %v90 = vld [vmem:[#allocation5 + $0x118] sm:$0xff]
    %v91 = vld [vmem:[#allocation5 + $0x120] sm:$0xff]
    %v92 = vld [vmem:[#allocation5 + $0x128] sm:$0xff]
    %v93 = vld [vmem:[#allocation5 + $0x130] sm:$0xff]
    %v94 = vld [vmem:[#allocation5 + $0x138] sm:$0xff]
    %v95 = vld [vmem:[#allocation5 + $0x140] sm:$0xff]
    %v96 = vld [vmem:[#allocation5 + $0x148] sm:$0xff]
    %v97 = vld [vmem:[#allocation5 + $0x150] sm:$0xff]
    %v98 = vld [vmem:[#allocation5 + $0x158] sm:$0xff]
    %v99 = vld [vmem:[#allocation5 + $0x160] sm:$0xff]
    %v100 = vld [vmem:[#allocation5 + $0x168] sm:$0xff]
    %v101 = vld [vmem:[#allocation5 + $0x170] sm:$0xff]
    %v102 = vld [vmem:[#allocation5 + $0x178] sm:$0xff]
    %v103 = vld [vmem:[#allocation5 + $0x180] sm:$0xff]
    %v104 = vld [vmem:[#allocation5 + $0x188] sm:$0xff]
    %v105 = vld [vmem:[#allocation5 + $0x190] sm:$0xff]
    %v106 = vld [vmem:[#allocation5 + $0x198] sm:$0xff]
    %v107 = vld [vmem:[#allocation5 + $0x1a0] sm:$0xff]
    %v108 = vld [vmem:[#allocation5 + $0x1a8] sm:$0xff]
    %v109 = vld [vmem:[#allocation5 + $0x1b0] sm:$0xff]
    %v110 = vld [vmem:[#allocation5 + $0x1b8] sm:$0xff]
    %v111 = vld [vmem:[#allocation5 + $0x1c0] sm:$0xff]
    %v112 = vld [vmem:[#allocation5 + $0x1c8] sm:$0xff]
    %v113 = vld [vmem:[#allocation5 + $0x1d0] sm:$0xff]
    %v114 = vld [vmem:[#allocation5 + $0x1d8] sm:$0xff]
    %v115 = vld [vmem:[#allocation5 + $0x1e0] sm:$0xff]
    %v116 = vld [vmem:[#allocation5 + $0x1e8] sm:$0xff]
    %v117 = vld [vmem:[#allocation5 + $0x1f0] sm:$0xff]
    %v118 = vld [vmem:[#allocation5 + $0x1f8] sm:$0xff]
    %v119 = vld [vmem:[%s2] sm:$0x1]
    %v121 = vperm.slane %v119, 0
    %123 = vmatpush.msra.mxu0 %v70
    %124 = vmatpush.msra.mxu0 %v69
    %125 = vmatpush.msra.mxu0 %v68
    %126 = vmatpush.msra.mxu0 %v67
    %127 = vmatpush.msra.mxu0 %v66
    %128 = vmatpush.msra.mxu0 %v65
    %129 = vmatpush.msra.mxu0 %v64
    %130 = vmatpush.msra.mxu0 %v63
    %131 = vmatpush.msra.mxu0 %v62
    %132 = vmatpush.msra.mxu0 %v61
    %133 = vmatpush.msra.mxu0 %v60
    %134 = vmatpush.msra.mxu0 %v59
    %135 = vmatpush.msra.mxu0 %v58
    %136 = vmatpush.msra.mxu0 %v57
    %137 = vmatpush.msra.mxu0 %v56
    %138 = vmatpush.msra.mxu0 %v55
    %139 = vmatmul.f32.gmra.mxu0 %v51
    %v140 = vpop.f32.mrf.mxu0
    %v141 = vadd.f32 %v121, %v140
    %142 = vdwg.mxu0
    %143 = vmatpush.msra.mxu0 %v86
    %144 = vmatpush.msra.mxu0 %v85
    %145 = vmatpush.msra.mxu0 %v84
    %146 = vmatpush.msra.mxu0 %v83
    %147 = vmatpush.msra.mxu0 %v82
    %148 = vmatpush.msra.mxu0 %v81
    %149 = vmatpush.msra.mxu0 %v80
    %150 = vmatpush.msra.mxu0 %v79
    %151 = vmatpush.msra.mxu0 %v78
    %152 = vmatpush.msra.mxu0 %v77
    %153 = vmatpush.msra.mxu0 %v76
    %154 = vmatpush.msra.mxu0 %v75
    %155 = vmatpush.msra.mxu0 %v74
    %156 = vmatpush.msra.mxu0 %v73
    %157 = vmatpush.msra.mxu0 %v72
    %158 = vmatpush.msra.mxu0 %v71
    %159 = vmatmul.f32.gmra.mxu0 %v52
    %v160 = vpop.f32.mrf.mxu0
    %v161 = vadd.f32 %v141, %v160
    %162 = vdwg.mxu0
    %163 = vmatpush.msra.mxu0 %v102
    %164 = vmatpush.msra.mxu0 %v101
    %165 = vmatpush.msra.mxu0 %v100
    %166 = vmatpush.msra.mxu0 %v99
    %167 = vmatpush.msra.mxu0 %v98
    %168 = vmatpush.msra.mxu0 %v97
    %169 = vmatpush.msra.mxu0 %v96
    %170 = vmatpush.msra.mxu0 %v95
    %171 = vmatpush.msra.mxu0 %v94
    %172 = vmatpush.msra.mxu0 %v93
    %173 = vmatpush.msra.mxu0 %v92
    %174 = vmatpush.msra.mxu0 %v91
    %175 = vmatpush.msra.mxu0 %v90
    %176 = vmatpush.msra.mxu0 %v89
    %177 = vmatpush.msra.mxu0 %v88
    %178 = vmatpush.msra.mxu0 %v87
    %179 = vmatmul.f32.gmra.mxu0 %v53
    %v180 = vpop.f32.mrf.mxu0
    %v181 = vadd.f32 %v161, %v180
    %182 = vdwg.mxu0
    %183 = vmatpush.msra.mxu0 %v118
    %184 = vmatpush.msra.mxu0 %v117
    %185 = vmatpush.msra.mxu0 %v116
    %186 = vmatpush.msra.mxu0 %v115
    %187 = vmatpush.msra.mxu0 %v114
    %188 = vmatpush.msra.mxu0 %v113
    %189 = vmatpush.msra.mxu0 %v112
    %190 = vmatpush.msra.mxu0 %v111
    %191 = vmatpush.msra.mxu0 %v110
    %192 = vmatpush.msra.mxu0 %v109
    %193 = vmatpush.msra.mxu0 %v108
    %194 = vmatpush.msra.mxu0 %v107
    %195 = vmatpush.msra.mxu0 %v106
    %196 = vmatpush.msra.mxu0 %v105
    %197 = vmatpush.msra.mxu0 %v104
    %198 = vmatpush.msra.mxu0 %v103
    %199 = vmatmul.f32.gmra.mxu0 %v54
    %v200 = vpop.f32.mrf.mxu0
    %v201 = vadd.f32 %v181, %v200
    %202 = vdwg.mxu0
    %v203 = vmax.f32 %v201, 0.0
    %v204 = vld [vmem:[%s3] sm:$0x1]
    %v206 = vperm.slane %v204, 0
    %v208 = vmul.f32 %v203, %v206
    %209 = vadd.xlane.f32.xlu0 %v208
    %v210 = vpop.xlane.xlu0 %209
    %s211 = sld [smem:[#allocation2]]
    %v212 = vstv %s211
    %v213 = vadd.f32 %v210, %v212
    %vm214 = vcmask 7168
    %215 = vst.msk [vmem:[%s5] sm:$0xff] %vm214, %v213
    // Predicated region
    $region30: #{simple_model.1} parent=1 // pred_check
      _
    $region31: #{simple_model.1} parent=1 // pred_check_branch
      %217 = sbr.rel (0) target = $region33
    $region32: #{simple_model.1} parent=1 // pred_region
      _
    $region33: #{simple_model.1} parent=1 // pred_fallthru
      _
    // Predicated region
    $region34: #{simple_model.1} parent=1 // pred_check
      _
    $region35: #{simple_model.1} parent=1 // pred_check_branch
      %219 = sbr.rel (0) target = $region37
    $region36: #{simple_model.1} parent=1 // pred_region
      _
    $region37: #{simple_model.1} parent=1 // pred_fallthru
      _
    %220 = vsyncpa [#allocation4], 1
    %221 = vsyncpa [#allocation6], 1

</llo_original>
